<compile_context>
chip_gen: v7x
topology: tpu7x:2x2x1
jax: 0.10.0
libtpu: 0.0.40
codegen_flags: <defaults>
</compile_context>

<pallas_src>
import functools

import jax
import jax.numpy as jnp
from jax.experimental import pallas as pl
from jax.experimental.pallas import tpu as pltpu


def _round_up(x: int, m: int) -> int:
    return ((x + m - 1) // m) * m


def _sublane_multiple(dtype) -> int:
    itemsize = jnp.dtype(dtype).itemsize
    return {4: 8, 2: 16, 1: 32}.get(itemsize, 8)


@functools.lru_cache(maxsize=1)
def _vmem_capacity_bytes() -> int:
    """Physical per-core VMEM; falls back to the smallest (v7x: 64 MiB/TC)."""
    try:
        cap = getattr(pltpu.get_tpu_info(), "vmem_capacity_bytes", None)
        if cap:
            return int(cap)
    except Exception:
        pass
    return 64 * 1024 * 1024


def _divisors_desc(n: int, cap: int, quantum: int):
    """Multiples of `quantum` that divide `n`, descending, capped at `cap`."""
    top = min(cap, n)
    top -= top % quantum
    opts = [d for d in range(top, 0, -quantum) if n % d == 0]
    return opts or [quantum]


def _plan(m, k_pad, n_pad, cbytes, obytes, budget, sublane, collapse_k):
    """Pick (tm, tn, tk, split_k, working_set_bytes) for the matmul grid."""
    big = budget >= 72 * 1024 * 1024          # 128-MiB-VMEM chips (v5e / v6e)
    tm_cap = 1024 if big else 512
    tn_cap = 2048 if big else 1024
    tk_cap = 1024 if cbytes <= 2 else 512

    tm = min(tm_cap, _round_up(m, sublane))
    tn_opts = _divisors_desc(n_pad, tn_cap, 128)
    tk_opts = _divisors_desc(k_pad, tk_cap, 128)

    def ws_of(tm_, tn_, tk_, split):
        ws = 2 * (tm_ * tk_ + tk_ * tn_ + tn_) * cbytes   # 2x-buffered x / W / bias
        ws += 2 * tm_ * tn_ * obytes                       # 2x-buffered output tile
        if split and obytes != 4:
            ws += tm_ * tn_ * 4                            # f32 accumulator scratch
        return ws

    # Prefer dropping the K grid axis (whole reduction per tile) when it fits.
    if collapse_k is not False:
        candidate_tns = tn_opts if collapse_k else tn_opts[:1]
        for tn in candidate_tns:
            w = ws_of(tm, tn, k_pad, False)
            if w <= budget:
                return tm, tn, k_pad, False, w

    # Split-K: shrink (tn, tk, tm) until the working set fits the budget.
    tm_ = tm
    while True:
        for tn in tn_opts:
            for tk in tk_opts:
                w = ws_of(tm_, tn, tk, True)
                if w <= budget:
                    return tm_, tn, tk, True, w
        if tm_ <= sublane:
            tn, tk = tn_opts[-1], tk_opts[-1]
            return sublane, tn, tk, True, ws_of(sublane, tn, tk, True)
        tm_ = max(sublane, _round_up(tm_ // 2, sublane))


# ----------------------------- kernels ------------------------------------ #
def _qkv_kernel_fullk(x_ref, w_ref, b_ref, o_ref):
    """Full-K per tile: one dot, bias inline, no scratch, no phases."""
    acc = jnp.dot(x_ref[...], w_ref[...], preferred_element_type=jnp.float32)
    o_ref[...] = (acc + b_ref[...].astype(jnp.float32)).astype(o_ref.dtype)


def _qkv_kernel_splitk_f32(x_ref, w_ref, b_ref, o_ref):
    """Split-K, f32 output: accumulate directly into o_ref (no scratch)."""
    @pl.when(pl.program_id(2) == 0)
    def _():
        o_ref[...] = jnp.broadcast_to(b_ref[...].astype(jnp.float32), o_ref.shape)

    o_ref[...] += jnp.dot(x_ref[...], w_ref[...], preferred_element_type=jnp.float32)


def _qkv_kernel_splitk(x_ref, w_ref, b_ref, o_ref, acc_ref):
    """Split-K, non-f32 output: f32 scratch accumulator seeded with the bias."""
    k = pl.program_id(2)

    @pl.when(k == 0)
    def _():
        acc_ref[...] = jnp.broadcast_to(b_ref[...].astype(jnp.float32), acc_ref.shape)

    acc_ref[...] += jnp.dot(x_ref[...], w_ref[...], preferred_element_type=jnp.float32)

    @pl.when(k == pl.num_programs(2) - 1)
    def _():
        o_ref[...] = acc_ref[...].astype(o_ref.dtype)


# ----------------------------- wrapper ------------------------------------- #
def fuse_qkv_params(wq, bq, wk, bk, wv, bv, compute_dtype=None):
    """Fuse + lane-pad the three nn.Linear params ONCE at setup (not per call).

    Returns (W_qkv [K_pad, N_pad], b_qkv [1, N_pad], out_dim) with columns
    ordered q | k | v, matching torch.concat([q, k, v], dim=-1).
    Pass compute_dtype=jnp.bfloat16 to run the matmul in bf16 (f32 accumulate).
    """
    w_qkv = jnp.concatenate([wq.T, wk.T, wv.T], axis=-1)        # (K, 3*out_third)
    b_qkv = jnp.concatenate([bq, bk, bv], axis=-1)[None, :]     # (1, 3*out_third)
    if compute_dtype is not None:
        w_qkv = w_qkv.astype(compute_dtype)
        b_qkv = b_qkv.astype(compute_dtype)
    k_true, out_dim = w_qkv.shape
    k_pad = _round_up(k_true, 128)
    n_pad = _round_up(out_dim, 128)
    if (k_pad, n_pad) != (k_true, out_dim):
        w_qkv = jnp.pad(w_qkv, ((0, k_pad - k_true), (0, n_pad - out_dim)))
        b_qkv = jnp.pad(b_qkv, ((0, 0), (0, n_pad - out_dim)))
    return w_qkv, b_qkv, out_dim


@functools.partial(jax.jit, static_argnames=("out_dim", "collapse_k"))
def qkv_forward(x, w_qkv, b_qkv, out_dim, collapse_k=None):
    """x: [..., in_features]; w_qkv: [K_pad, N_pad]; b_qkv: [1, N_pad].

    collapse_k: None = auto (drop K grid axis when it fits VMEM),
                False = force split-K (mainly for testing), True = prefer collapse.
    """
    lead_shape = x.shape[:-1]
    k_true = x.shape[-1]
    k_pad, n_pad = w_qkv.shape
    out_dtype = x.dtype
    compute_dtype = w_qkv.dtype

    m = 1
    for d in lead_shape:
        m *= d
    x2d = x.reshape(m, k_true).astype(compute_dtype)

    cbytes = jnp.dtype(compute_dtype).itemsize
    obytes = jnp.dtype(out_dtype).itemsize
    sublane = _sublane_multiple(compute_dtype)

    capacity = _vmem_capacity_bytes()
    budget = (capacity * 3) // 4          # headroom: ~48 MiB on v7x, ~96 MiB on v5e/v6e

    tm, tn, tk, split, ws = _plan(
        m, k_pad, n_pad, cbytes, obytes, budget, sublane, collapse_k)
    m_pad = _round_up(m, tm)

    # Only x is padded per call (zeros contribute nothing to the reduction);
    # the fused weight/bias were padded once at setup.
    if m_pad != m or k_pad != k_true:
        x2d = jnp.pad(x2d, ((0, m_pad - m), (0, k_pad - k_true)))

    vmem_limit = int(min(capacity, max(ws + ws // 4 + (4 << 20), 32 << 20)))

    if not split:
        grid = (m_pad // tm, n_pad // tn)
        in_specs = [
            pl.BlockSpec((tm, k_pad), lambda i, j: (i, 0)),   # x tile (full K)
            pl.BlockSpec((k_pad, tn), lambda i, j: (0, j)),   # W tile (full K)
            pl.BlockSpec((1, tn), lambda i, j: (0, j)),       # bias tile
        ]
        out_specs = pl.BlockSpec((tm, tn), lambda i, j: (i, j))
        scratch_shapes = []
        kernel = _qkv_kernel_fullk
        dim_sem = ("parallel", "parallel")
    else:
        grid = (m_pad // tm, n_pad // tn, k_pad // tk)
        in_specs = [
            pl.BlockSpec((tm, tk), lambda i, j, k: (i, k)),   # x tile
            pl.BlockSpec((tk, tn), lambda i, j, k: (k, j)),   # W tile
            pl.BlockSpec((1, tn), lambda i, j, k: (0, j)),    # bias tile
        ]
        out_specs = pl.BlockSpec((tm, tn), lambda i, j, k: (i, j))
        if jnp.dtype(out_dtype) == jnp.float32:
            scratch_shapes = []
            kernel = _qkv_kernel_splitk_f32     # accumulate directly into o_ref
        else:
            scratch_shapes = [pltpu.VMEM((tm, tn), jnp.float32)]
            kernel = _qkv_kernel_splitk
        dim_sem = ("parallel", "parallel", "arbitrary")

    cost = pl.CostEstimate(
        flops=2 * m * k_true * out_dim,
        transcendentals=0,
        bytes_accessed=(
            m_pad * k_pad * cbytes
            + k_pad * n_pad * cbytes
            + n_pad * cbytes
            + m_pad * n_pad * obytes
        ),
    )

    out2d = pl.pallas_call(
        kernel,
        out_shape=jax.ShapeDtypeStruct((m_pad, n_pad), out_dtype),
        grid_spec=pltpu.PrefetchScalarGridSpec(
            num_scalar_prefetch=0,
            grid=grid,
            in_specs=in_specs,
            out_specs=out_specs,
            scratch_shapes=scratch_shapes,
        ),
        compiler_params=pltpu.CompilerParams(
            dimension_semantics=dim_sem,
            vmem_limit_bytes=vmem_limit,
        ),
        cost_estimate=cost,
    )(x2d, w_qkv, b_qkv)

    if m_pad != m or n_pad != out_dim:
        out2d = out2d[:m, :out_dim]
    return out2d.reshape(*lead_shape, out_dim)


def init_linear_params(key, out_f, in_f, dtype=jnp.float32):
    # Deterministic init mimicking torch.nn.Linear default (uniform +/- 1/sqrt(in_f)).
    kw, kb = jax.random.split(key)
    bound = 1.0 / (in_f ** 0.5)
    w = jax.random.uniform(kw, (out_f, in_f), dtype, minval=-bound, maxval=bound)
    b = jax.random.uniform(kb, (out_f,), dtype, minval=-bound, maxval=bound)
    return w, b


if __name__ == "__main__":
    batch, seq, in_features = 2, 8, 32
    out_features = 48                      # out_features // 3 == 16 per projection
    out_third = out_features // 3

    key = jax.random.PRNGKey(0)
    kx, kq, kk, kv = jax.random.split(key, 4)

    x = jax.random.normal(kx, (batch, seq, in_features), dtype=jnp.float32)
    wq, bq = init_linear_params(kq, out_third, in_features)
    wk, bk = init_linear_params(kk, out_third, in_features)
    wv, bv = init_linear_params(kv, out_third, in_features)

    # Parameter fusion + padding happens once, outside the forward path.
    w_qkv, b_qkv, out_dim = fuse_qkv_params(wq, bq, wk, bk, wv, bv)

    out = qkv_forward(x, w_qkv, b_qkv, out_dim)                         # auto: K collapsed
    out_split = qkv_forward(x, w_qkv, b_qkv, out_dim, collapse_k=False)  # forced split-K path
    jax.block_until_ready((out, out_split))

    # Reference check in plain JAX (same semantics as the PyTorch forward).
    q_ref = x @ wq.T + bq
    k_ref = x @ wk.T + bk
    v_ref = x @ wv.T + bv
    ref = jnp.concatenate([q_ref, k_ref, v_ref], axis=-1)
    assert out.shape == (batch, seq, out_third * 3)
    assert jnp.allclose(out, ref, atol=1e-5, rtol=1e-5)
    assert jnp.allclose(out_split, ref, atol=1e-5, rtol=1e-5)

    print("KERNEL_OK")
</pallas_src>

<mosaic_0001>
module attributes {stable_mosaic.version = 11 : i64} {
  func.func @_qkv_kernel_fullk(%arg0: i32, %arg1: i32, %arg2: memref<16x128xf32, #tpu.memory_space<vmem>>, %arg3: memref<128x128xf32, #tpu.memory_space<vmem>>, %arg4: memref<1x128xf32, #tpu.memory_space<vmem>>, %arg5: memref<16x128xf32, #tpu.memory_space<vmem>>) attributes {dimension_semantics = [#tpu.dimension_semantics<parallel>, #tpu.dimension_semantics<parallel>], iteration_bounds = array<i64: 1, 1>, scalar_prefetch = 0 : i64, scratch_operands = 0 : i64, tpu.core_type = #tpu.core_type<tc>, window_params = [{transform_indices = @transform_0, window_bounds = array<i64: 16, 128>}, {transform_indices = @transform_1, window_bounds = array<i64: 128, 128>}, {transform_indices = @transform_2, window_bounds = array<i64: 1, 128>}, {transform_indices = @transform_3, window_bounds = array<i64: 16, 128>}]} {
    %c0 = arith.constant 0 : index
    %c0_0 = arith.constant 0 : index
    %0 = vector.load %arg2[%c0, %c0_0] : memref<16x128xf32, #tpu.memory_space<vmem>>, vector<16x128xf32>
    %c0_1 = arith.constant 0 : index
    %c0_2 = arith.constant 0 : index
    %1 = vector.load %arg3[%c0_1, %c0_2] : memref<128x128xf32, #tpu.memory_space<vmem>>, vector<128x128xf32>
    %cst = arith.constant dense<0.000000e+00> : vector<16x128xf32>
    %2 = tpu.matmul %0, %1, %cst {dimension_numbers = #tpu.dot_dimension_numbers<[1], [0], [0], [1], [0, 0, 1, 1], [], []>} : vector<16x128xf32>, vector<128x128xf32>, vector<16x128xf32> -> vector<16x128xf32>
    %c0_3 = arith.constant 0 : index
    %c0_4 = arith.constant 0 : index
    %3 = vector.load %arg4[%c0_3, %c0_4] : memref<1x128xf32, #tpu.memory_space<vmem>>, vector<1x128xf32>
    %4 = vector.broadcast %3 : vector<1x128xf32> to vector<16x128xf32>
    %5 = arith.addf %2, %4 : vector<16x128xf32>
    %c0_5 = arith.constant 0 : index
    %c0_6 = arith.constant 0 : index
    %6 = vector.load %arg5[%c0_5, %c0_6] : memref<16x128xf32, #tpu.memory_space<vmem>>, vector<16x128xf32>
    tpu.vector_store %arg5[%c0_5, %c0_6], %5 {strides = array<i32>} : memref<16x128xf32, #tpu.memory_space<vmem>>, vector<16x128xf32>,
    return
  }
  func.func @transform_0(%arg0: i32, %arg1: i32) -> (i32, i32) {
    %c0_i32 = arith.constant 0 : i32
    %c0_i32_0 = arith.constant 0 : i32
    return %arg0, %c0_i32 : i32, i32
  }
  func.func @transform_1(%arg0: i32, %arg1: i32) -> (i32, i32) {
    %c0_i32 = arith.constant 0 : i32
    %c0_i32_0 = arith.constant 0 : i32
    return %c0_i32, %arg1 : i32, i32
  }
  func.func @transform_2(%arg0: i32, %arg1: i32) -> (i32, i32) {
    %c0_i32 = arith.constant 0 : i32
    %c0_i32_0 = arith.constant 0 : i32
    return %c0_i32, %arg1 : i32, i32
  }
  func.func @transform_3(%arg0: i32, %arg1: i32) -> (i32, i32) {
    %c0_i32 = arith.constant 0 : i32
    return %arg0, %arg1 : i32, i32
  }
}

</mosaic_0001>

<llo_original>
// kernel: qkv_forward.1
$region0: #{qkv_forward.1}
  #allocation0 [shape = 'u32[]', space=smem, size = 0x4, offset = 0x4, fixed_abs, tag = 'smem constant byte address 0x4 - core index']
  #allocation1 [shape = 'u32[144,128]{1,0:T(1,128)}', space=vmem, size = 0x12000, scoped, tag = 'internal scratch']
  %s0 = inlined_call_operand.vmem [shape: f32[16,128], index: 0, kind: input, shape index: {}]
  %s1 = inlined_call_operand.hbm [shape: f32[128,128], index: 1, kind: input, shape index: {}]
  %s2 = inlined_call_operand.vmem [shape: f32[1,128], index: 2, kind: input, shape index: {}]
  %s3 = inlined_call_operand.vmem [shape: f32[16,128], index: 3, kind: output, shape index: {}]
  %s4 = sld [smem:[#allocation0]]
  $region26: #{qkv_forward.1} parent=0
    _
  %s6 = ssub.s32 1, %s4
  %s7 = scalar_select 0, %s6, %s4
  $region1: #{qkv_forward.1} parent=0
    #allocation2 [shape = 'u8[65536]{0}', space=vmem, size = 0x10000, scoped, tag = 'input window, operand 1, single buffered']
    #allocation3 [shape = 's32[1]{0}', space=sflag, size = 0x4, scoped, tag = 'scoped memory for qkv_forward.1']
    %8 = vsyncpa [#allocation3], 0
    // Predicated region
    $region2: #{qkv_forward.1} parent=1 // pred_check
      _
    $region3: #{qkv_forward.1} parent=1 // pred_check_branch
      %10 = sbr.rel (0) target = $region5
    $region4: #{qkv_forward.1} parent=1 // pred_region
      _
    $region5: #{qkv_forward.1} parent=1 // pred_fallthru
      _
    // Predicated region
    $region6: #{qkv_forward.1} parent=1 // pred_check
      _
    $region7: #{qkv_forward.1} parent=1 // pred_check_branch
      %12 = sbr.rel (0) target = $region9
    $region8: #{qkv_forward.1} parent=1 // pred_region
      %s14 = ssub.s32 2048, 2048
      %15 = vsyncadd [#allocation3], %s14
      %s16 = sshll.u32 [#allocation2], 4
      %s17 = int_to_ptr.vmem [resolvable:$true] %s16
      %22 = dma.hbm_to_vmem [thread:$0]  %s1, 2048, %s17, [#allocation3], 128, 128, 8
    $region9: #{qkv_forward.1} parent=1 // pred_fallthru
      _
    // Predicated region
    $region10: #{qkv_forward.1} parent=1 // pred_check
      _
    $region11: #{qkv_forward.1} parent=1 // pred_check_branch
      %24 = sbr.rel (0) target = $region13
    $region12: #{qkv_forward.1} parent=1 // pred_region
      _
    $region13: #{qkv_forward.1} parent=1 // pred_fallthru
      _
    // Predicated region
    $region14: #{qkv_forward.1} parent=1 // pred_check
      _
    $region15: #{qkv_forward.1} parent=1 // pred_check_branch
      %26 = sbr.rel (0) target = $region17
    $region16: #{qkv_forward.1} parent=1 // pred_region
      %27 = dma.done [#allocation3], 2048
    $region17: #{qkv_forward.1} parent=1 // pred_fallthru
      _
    %v28 = vld [vmem:[%s0] sm:$0xff]
    %v29 = vld [vmem:[%s0 + $0x8] sm:$0xff]
    %v30 = vld [vmem:[#allocation2] sm:$0xff]
    %v31 = vld [vmem:[#allocation2 + $0x8] sm:$0xff]
    %v32 = vld [vmem:[#allocation2 + $0x10] sm:$0xff]
    %v33 = vld [vmem:[#allocation2 + $0x18] sm:$0xff]
    %v34 = vld [vmem:[#allocation2 + $0x20] sm:$0xff]
    %v35 = vld [vmem:[#allocation2 + $0x28] sm:$0xff]
    %v36 = vld [vmem:[#allocation2 + $0x30] sm:$0xff]
    %v37 = vld [vmem:[#allocation2 + $0x38] sm:$0xff]
    %v38 = vld [vmem:[#allocation2 + $0x40] sm:$0xff]
    %v39 = vld [vmem:[#allocation2 + $0x48] sm:$0xff]
    %v40 = vld [vmem:[#allocation2 + $0x50] sm:$0xff]
    %v41 = vld [vmem:[#allocation2 + $0x58] sm:$0xff]
    %v42 = vld [vmem:[#allocation2 + $0x60] sm:$0xff]
    %v43 = vld [vmem:[#allocation2 + $0x68] sm:$0xff]
    %v44 = vld [vmem:[#allocation2 + $0x70] sm:$0xff]
    %v45 = vld [vmem:[#allocation2 + $0x78] sm:$0xff]
    %v46 = vld [vmem:[%s2] sm:$0x1]
    %v48 = vlaneseq
    %v49 = vshrl.u32 %v48, 7
    %v50 = vsub.s32 0, %v49
    %v51 = vrot.slane %v46, %v50
    %53 = vmatprep.subr.mxu0 0.0
    %54 = vmatpush1.msra.mxu0 %v30
    %55 = vmatprep.subr.mxu0 0.0
    %56 = vmatpush1.msra.mxu0 %v31
    %57 = vmatprep.subr.mxu0 0.0
    %58 = vmatpush1.msra.mxu0 %v32
    %59 = vmatprep.subr.mxu0 0.0
    %60 = vmatpush1.msra.mxu0 %v33
    %61 = vmatprep.subr.mxu0 0.0
    %62 = vmatpush1.msra.mxu0 %v34
    %63 = vmatprep.subr.mxu0 0.0
    %64 = vmatpush1.msra.mxu0 %v35
    %65 = vmatprep.subr.mxu0 0.0
    %66 = vmatpush1.msra.mxu0 %v36
    %67 = vmatprep.subr.mxu0 0.0
    %68 = vmatpush1.msra.mxu0 %v37
    %69 = vmatprep.subr.mxu0 0.0
    %70 = vmatpush1.msra.mxu0 %v38
    %71 = vmatprep.subr.mxu0 0.0
    %72 = vmatpush1.msra.mxu0 %v39
    %73 = vmatprep.subr.mxu0 0.0
    %74 = vmatpush1.msra.mxu0 %v40
    %75 = vmatprep.subr.mxu0 0.0
    %76 = vmatpush1.msra.mxu0 %v41
    %77 = vmatprep.subr.mxu0 0.0
    %78 = vmatpush1.msra.mxu0 %v42
    %79 = vmatprep.subr.mxu0 0.0
    %80 = vmatpush1.msra.mxu0 %v43
    %81 = vmatprep.subr.mxu0 0.0
    %82 = vmatpush1.msra.mxu0 %v44
    %83 = vmatprep.subr.mxu0 0.0
    %84 = vmatpush1.msra.mxu0 %v45
    %85 = vmatprep.subr.mxu0 0.0
    %86 = vmatpush1.msra.mxu0 0.0
    %87 = vmatprep.subr.mxu0 0.0
    %88 = vmatpush1.msra.mxu0 0.0
    %89 = vmatprep.subr.mxu0 0.0
    %90 = vmatpush1.msra.mxu0 0.0
    %91 = vmatprep.subr.mxu0 0.0
    %92 = vmatpush1.msra.mxu0 0.0
    %93 = vmatprep.subr.mxu0 0.0
    %94 = vmatpush1.msra.mxu0 0.0
    %95 = vmatprep.subr.mxu0 0.0
    %96 = vmatpush1.msra.mxu0 0.0
    %97 = vmatprep.subr.mxu0 0.0
    %98 = vmatpush1.msra.mxu0 0.0
    %99 = vmatprep.subr.mxu0 0.0
    %100 = vmatpush1.msra.mxu0 0.0
    %101 = vmatprep.subr.mxu0 0.0
    %102 = vmatpush1.msra.mxu0 0.0
    %103 = vmatprep.subr.mxu0 0.0
    %104 = vmatpush1.msra.mxu0 0.0
    %105 = vmatprep.subr.mxu0 0.0
    %106 = vmatpush1.msra.mxu0 0.0
    %107 = vmatprep.subr.mxu0 0.0
    %108 = vmatpush1.msra.mxu0 0.0
    %109 = vmatprep.subr.mxu0 0.0
    %110 = vmatpush1.msra.mxu0 0.0
    %111 = vmatprep.subr.mxu0 0.0
    %112 = vmatpush1.msra.mxu0 0.0
    %113 = vmatprep.subr.mxu0 0.0
    %114 = vmatpush1.msra.mxu0 0.0
    %115 = vmatprep.subr.mxu0 0.0
    %116 = vmatpush1.msra.mxu0 0.0
    %117 = vmatprep.mubr.f32.mxu0 0.0
    %118 = vmatmul.mubr.f32.gmra.mrb[0].mxu0 %v28
    %v119 = vpop.f32.mrb[0].mxu0
    %v120 = vadd.f32 %v51, %v119
    %v121 = vpop.f32.mrb[0].mxu0
    %122 = vmatprep.mubr.f32.mxu0 0.0
    %123 = vmatmul.mubr.f32.gmra.mrb[0].mxu0 %v29
    %v124 = vpop.f32.mrb[0].mxu0
    %v125 = vadd.f32 %v51, %v124
    %v126 = vpop.f32.mrb[0].mxu0
    %127 = vdwg.mxu0
    %128 = vst [vmem:[%s3] sm:$0xff] %v120
    %129 = vst [vmem:[%s3 + $0x8] sm:$0xff] %v125
    // Predicated region
    $region18: #{qkv_forward.1} parent=1 // pred_check
      _
    $region19: #{qkv_forward.1} parent=1 // pred_check_branch
      %131 = sbr.rel (0) target = $region21
    $region20: #{qkv_forward.1} parent=1 // pred_region
      _
    $region21: #{qkv_forward.1} parent=1 // pred_fallthru
      _
    // Predicated region
    $region22: #{qkv_forward.1} parent=1 // pred_check
      _
    $region23: #{qkv_forward.1} parent=1 // pred_check_branch
      %133 = sbr.rel (0) target = $region25
    $region24: #{qkv_forward.1} parent=1 // pred_region
      _
    $region25: #{qkv_forward.1} parent=1 // pred_fallthru
      _
    %134 = vsyncpa [#allocation3], 1

</llo_original>
